<compile_context>
chip_gen: v5e
topology: v5e:2x2
jax: 0.10.0
libtpu: 0.0.40
codegen_flags: <defaults>
</compile_context>

<pallas_src>
from functools import partial

import jax
import jax.numpy as jnp
from jax.experimental import pallas as pl
from jax.experimental.pallas import tpu as pltpu


def mlp_kernel(x_ref, w1_ref, b1_ref, w2_ref, b2_ref, o_ref):
    # Cast the f32 noise tile to the MXU compute dtype in-kernel (cheaper than
    # shipping a lane-padded bf16 copy of x through HBM).
    x = x_ref[...].astype(w1_ref.dtype)
    # Layer 1: (TB, E) @ (E, H) on the MXU, f32 accumulation.
    h = jnp.dot(x, w1_ref[...], preferred_element_type=jnp.float32)
    # Bias + ReLU in f32 on the VPU (v5e has no bf16 VPU datapath — keep f32 here).
    h = jnp.maximum(h + b1_ref[...], 0.0)
    # Layer 2: (TB, H) @ (H, E_pad) on the MXU, f32 accumulation.
    out = jnp.dot(h.astype(w2_ref.dtype), w2_ref[...],
                  preferred_element_type=jnp.float32)
    # Lane-dense (E_pad = multiple of 128) store in the narrow output dtype.
    o_ref[...] = (out + b2_ref[...]).astype(o_ref.dtype)


def _round_up(x, m):
    return (x + m - 1) // m * m


def _batch_tiling(B, block_b):
    """Pick (TB, B_pad). One step for small/medium batches; >=2 even, 128-aligned
    steps (capped at block_b rows) for large batches so v7x's 2 TCs both work."""
    if B < 512:
        TB = _round_up(max(B, 8), 8)
        return TB, TB
    n_steps = max(2, -(-B // block_b))
    if n_steps % 2:                      # prefer an even step count for 2-TC split
        n_steps += 1
    TB = _round_up(-(-B // n_steps), 128)   # 128 = MXU M granularity on v5e
    return TB, TB * n_steps


def pack_params(w1, b1, w2, b2, *, compute_dtype=jnp.bfloat16):
    """One-time packing (hoisted out of forward): bf16 weight casts, lane padding of
    the output/N side only (w2 columns, b2), biases kept in f32 for the VPU path."""
    E, H = w1.shape
    assert w2.shape == (H, E) and b1.shape == (H,) and b2.shape == (E,)
    E_pad = max(_round_up(E, 128), 128)
    w1_c = w1.astype(compute_dtype)                                    # (E, H), K not padded
    w2_p = jnp.zeros((H, E_pad), compute_dtype).at[:, :E].set(w2.astype(compute_dtype))
    b1_c = b1.reshape(1, H).astype(jnp.float32)
    b2_p = jnp.zeros((1, E_pad), jnp.float32).at[0, :E].set(b2.astype(jnp.float32))
    return w1_c, b1_c, w2_p, b2_p


@partial(jax.jit, static_argnames=("block_b", "out_dtype", "return_padded"))
def gan_generator_forward(x, w1, b1, w2, b2, *, block_b=1024,
                          out_dtype=jnp.bfloat16, return_padded=False):
    """x: [B, E] f32 noise; packed params from pack_params().
    Returns creator(x): [B, E] in out_dtype (or the padded [B_pad, E_pad] slab)."""
    B, E = x.shape
    H = w1.shape[1]
    E_pad = w2.shape[1]
    assert w1.shape == (E, H) and b1.shape == (1, H) and b2.shape == (1, E_pad)

    TB, B_pad = _batch_tiling(B, block_b)
    x_p = x if B_pad == B else jnp.pad(x, ((0, B_pad - B), (0, 0)))

    out_padded = pl.pallas_call(
        mlp_kernel,
        out_shape=jax.ShapeDtypeStruct((B_pad, E_pad), out_dtype),
        grid=(B_pad // TB,),
        in_specs=[
            # x streams with the grid; last block dim == full array dim (E), so no
            # lane padding is required on the input side.
            pl.BlockSpec((TB, E), lambda i: (i, 0)),
            # Weights / biases: constant index_map -> resident in VMEM, no re-DMA.
            pl.BlockSpec((E, H), lambda i: (0, 0)),
            pl.BlockSpec((1, H), lambda i: (0, 0)),
            pl.BlockSpec((H, E_pad), lambda i: (0, 0)),
            pl.BlockSpec((1, E_pad), lambda i: (0, 0)),
        ],
        out_specs=pl.BlockSpec((TB, E_pad), lambda i: (i, 0)),
        compiler_params=pltpu.CompilerParams(
            dimension_semantics=("parallel",),   # batch steps independent (v7x 2xTC)
        ),
    )(x_p, w1, b1, w2, b2)

    if return_padded:
        # Padded rows hold ReLU(b1)@w2+b2 and columns >= E are zero+b2-pad garbage:
        # only consume [:B, :E] downstream, or mask.
        return out_padded
    return out_padded[:B, :E]


def _init_linear(key, fan_in, fan_out, dtype=jnp.float32):
    """Deterministic init mimicking torch.nn.Linear default (uniform +-1/sqrt(fan_in)).
    Stored as [in, out] (transpose of PyTorch's [out, in]) so the kernel does x @ W."""
    kw, kb = jax.random.split(key)
    bound = 1.0 / (fan_in ** 0.5)
    w = jax.random.uniform(kw, (fan_in, fan_out), dtype, minval=-bound, maxval=bound)
    b = jax.random.uniform(kb, (fan_out,), dtype, minval=-bound, maxval=bound)
    return w, b


def _reference(x, w1, b1, w2, b2, compute_dtype, out_dtype):
    """Pure-JAX reference mirroring the kernel's precision chain
    (bf16 matmul inputs, f32 accumulation / elementwise, out_dtype store)."""
    f32 = jnp.float32
    xc = x.astype(compute_dtype).astype(f32)
    w1c = w1.astype(compute_dtype).astype(f32)
    w2c = w2.astype(compute_dtype).astype(f32)
    h = jnp.maximum(xc @ w1c + b1.astype(f32), 0.0)
    h = h.astype(compute_dtype).astype(f32)
    return (h @ w2c + b2.astype(f32)).astype(out_dtype)


if __name__ == "__main__":
    # Synthetic "dataframe" config: 2 categorical features with embedding size 6,
    # plus 4 numeric features -> embedded_size = 2*6 + 4 = 16.
    desired_embedding_size = 6
    n_cat, n_num = 2, 4
    embedded_size = n_cat * desired_embedding_size + n_num   # 16
    hidden = 256                                             # fixed in the module
    batch = 8                                                # table.shape[0]

    key = jax.random.PRNGKey(0)
    k_noise, k_l1, k_l2, k_big = jax.random.split(key, 4)

    # forward() input: torch.rand((B, embedded_size)) -> uniform [0, 1)
    x = jax.random.uniform(k_noise, (batch, embedded_size), jnp.float32)
    w1, b1 = _init_linear(k_l1, embedded_size, hidden)
    w2, b2 = _init_linear(k_l2, hidden, embedded_size)

    # One-time packing (hoisted out of the per-call path).
    w1_c, b1_c, w2_p, b2_p = pack_params(w1, b1, w2, b2)

    # Small (module-consistent) batch: single grid step, whole batch resident.
    out = jax.block_until_ready(gan_generator_forward(x, w1_c, b1_c, w2_p, b2_p))
    ref = _reference(x, w1, b1, w2, b2, jnp.bfloat16, jnp.bfloat16)
    assert out.shape == (batch, embedded_size)
    assert out.dtype == jnp.bfloat16
    assert jnp.allclose(out.astype(jnp.float32), ref.astype(jnp.float32),
                        atol=2e-2, rtol=2e-2)

    # Larger batch: tiled grid with >=2 "parallel" steps (TB=512) for v7x's two TCs.
    big_batch = 1024
    x_big = jax.random.uniform(k_big, (big_batch, embedded_size), jnp.float32)
    out_big = jax.block_until_ready(
        gan_generator_forward(x_big, w1_c, b1_c, w2_p, b2_p))
    ref_big = _reference(x_big, w1, b1, w2, b2, jnp.bfloat16, jnp.bfloat16)
    assert out_big.shape == (big_batch, embedded_size)
    assert jnp.allclose(out_big.astype(jnp.float32), ref_big.astype(jnp.float32),
                        atol=2e-2, rtol=2e-2)

    # TODO(synk): encode()/decode_output() operate on pandas DataFrames (embedding
    # lookups + argmax decode) and are not part of forward(); not implemented here.
    print("KERNEL_OK")
</pallas_src>

<mosaic_0001>
module attributes {stable_mosaic.version = 11 : i64} {
  func.func @mlp_kernel(%arg0: i32, %arg1: memref<8x16xf32, #tpu.memory_space<vmem>>, %arg2: memref<16x256xbf16, #tpu.memory_space<vmem>>, %arg3: memref<1x256xf32, #tpu.memory_space<vmem>>, %arg4: memref<256x128xbf16, #tpu.memory_space<vmem>>, %arg5: memref<1x128xf32, #tpu.memory_space<vmem>>, %arg6: memref<8x128xbf16, #tpu.memory_space<vmem>>) attributes {dimension_semantics = [#tpu.dimension_semantics<parallel>], iteration_bounds = array<i64: 1>, scalar_prefetch = 0 : i64, scratch_operands = 0 : i64, tpu.core_type = #tpu.core_type<tc>, window_params = [{transform_indices = @transform_0, window_bounds = array<i64: 8, 16>}, {pipeline_mode = #tpu.pipeline_mode<synchronous>, transform_indices = @transform_1, window_bounds = array<i64: 16, 256>}, {pipeline_mode = #tpu.pipeline_mode<synchronous>, transform_indices = @transform_2, window_bounds = array<i64: 1, 256>}, {pipeline_mode = #tpu.pipeline_mode<synchronous>, transform_indices = @transform_3, window_bounds = array<i64: 256, 128>}, {pipeline_mode = #tpu.pipeline_mode<synchronous>, transform_indices = @transform_4, window_bounds = array<i64: 1, 128>}, {transform_indices = @transform_5, window_bounds = array<i64: 8, 128>}]} {
    %c0 = arith.constant 0 : index
    %c0_0 = arith.constant 0 : index
    %0 = vector.load %arg1[%c0, %c0_0] : memref<8x16xf32, #tpu.memory_space<vmem>>, vector<8x16xf32>
    %1 = arith.truncf %0 : vector<8x16xf32> to vector<8x16xbf16>
    %c0_1 = arith.constant 0 : index
    %c0_2 = arith.constant 0 : index
    %2 = vector.load %arg2[%c0_1, %c0_2] : memref<16x256xbf16, #tpu.memory_space<vmem>>, vector<16x256xbf16>
    %cst = arith.constant dense<0.000000e+00> : vector<8x256xf32>
    %3 = tpu.matmul %1, %2, %cst {dimension_numbers = #tpu.dot_dimension_numbers<[1], [0], [0], [1], [0, 0, 1, 1], [], []>} : vector<8x16xbf16>, vector<16x256xbf16>, vector<8x256xf32> -> vector<8x256xf32>
    %c0_3 = arith.constant 0 : index
    %c0_4 = arith.constant 0 : index
    %4 = vector.load %arg3[%c0_3, %c0_4] : memref<1x256xf32, #tpu.memory_space<vmem>>, vector<1x256xf32>
    %5 = vector.broadcast %4 : vector<1x256xf32> to vector<8x256xf32>
    %6 = arith.addf %3, %5 : vector<8x256xf32>
    %cst_5 = arith.constant 0.000000e+00 : f32
    %7 = vector.broadcast %cst_5 : f32 to vector<8x256xf32>
    %8 = arith.maximumf %6, %7 : vector<8x256xf32>
    %9 = arith.truncf %8 : vector<8x256xf32> to vector<8x256xbf16>
    %c0_6 = arith.constant 0 : index
    %c0_7 = arith.constant 0 : index
    %10 = vector.load %arg4[%c0_6, %c0_7] : memref<256x128xbf16, #tpu.memory_space<vmem>>, vector<256x128xbf16>
    %cst_8 = arith.constant dense<0.000000e+00> : vector<8x128xf32>
    %11 = tpu.matmul %9, %10, %cst_8 {dimension_numbers = #tpu.dot_dimension_numbers<[1], [0], [0], [1], [0, 0, 1, 1], [], []>} : vector<8x256xbf16>, vector<256x128xbf16>, vector<8x128xf32> -> vector<8x128xf32>
    %c0_9 = arith.constant 0 : index
    %c0_10 = arith.constant 0 : index
    %12 = vector.load %arg5[%c0_9, %c0_10] : memref<1x128xf32, #tpu.memory_space<vmem>>, vector<1x128xf32>
    %13 = vector.broadcast %12 : vector<1x128xf32> to vector<8x128xf32>
    %14 = arith.addf %11, %13 : vector<8x128xf32>
    %15 = arith.truncf %14 : vector<8x128xf32> to vector<8x128xbf16>
    %c0_11 = arith.constant 0 : index
    %c0_12 = arith.constant 0 : index
    %16 = vector.load %arg6[%c0_11, %c0_12] : memref<8x128xbf16, #tpu.memory_space<vmem>>, vector<8x128xbf16>
    tpu.vector_store %arg6[%c0_11, %c0_12], %15 {strides = array<i32>} : memref<8x128xbf16, #tpu.memory_space<vmem>>, vector<8x128xbf16>,
    return
  }
  func.func @transform_0(%arg0: i32) -> (i32, i32) {
    %c0_i32 = arith.constant 0 : i32
    %c0_i32_0 = arith.constant 0 : i32
    return %arg0, %c0_i32 : i32, i32
  }
  func.func @transform_1(%arg0: i32) -> (i32, i32) {
    %c0_i32 = arith.constant 0 : i32
    %c0_i32_0 = arith.constant 0 : i32
    %c0_i32_1 = arith.constant 0 : i32
    return %c0_i32, %c0_i32_0 : i32, i32
  }
  func.func @transform_2(%arg0: i32) -> (i32, i32) {
    %c0_i32 = arith.constant 0 : i32
    %c0_i32_0 = arith.constant 0 : i32
    %c0_i32_1 = arith.constant 0 : i32
    return %c0_i32, %c0_i32_0 : i32, i32
  }
  func.func @transform_3(%arg0: i32) -> (i32, i32) {
    %c0_i32 = arith.constant 0 : i32
    %c0_i32_0 = arith.constant 0 : i32
    %c0_i32_1 = arith.constant 0 : i32
    return %c0_i32, %c0_i32_0 : i32, i32
  }
  func.func @transform_4(%arg0: i32) -> (i32, i32) {
    %c0_i32 = arith.constant 0 : i32
    %c0_i32_0 = arith.constant 0 : i32
    %c0_i32_1 = arith.constant 0 : i32
    return %c0_i32, %c0_i32_0 : i32, i32
  }
  func.func @transform_5(%arg0: i32) -> (i32, i32) {
    %c0_i32 = arith.constant 0 : i32
    %c0_i32_0 = arith.constant 0 : i32
    return %arg0, %c0_i32 : i32, i32
  }
}

</mosaic_0001>

<llo_original>
// kernel: gan_generator_forward.1
$region0: #{gan_generator_forward.1}
  #allocation0 [shape = 'u32[]', space=smem, size = 0x4, offset = 0x4, fixed_abs, tag = 'smem constant byte address 0x4 - core index']
  #allocation1 [shape = 'u32[72,128]{1,0:T(1,128)}', space=vmem, size = 0x9000, scoped, tag = 'internal scratch']
  %s0 = inlined_call_operand.hbm [shape: f32[8,16], index: 0, kind: input, shape index: {}]
  %s1 = inlined_call_operand.hbm [shape: bf16[16,256], index: 1, kind: input, shape index: {}]
  %s2 = inlined_call_operand.hbm [shape: f32[1,256], index: 2, kind: input, shape index: {}]
  %s3 = inlined_call_operand.hbm [shape: bf16[256,128], index: 3, kind: input, shape index: {}]
  %s4 = inlined_call_operand.vmem [shape: f32[1,128], index: 4, kind: input, shape index: {}]
  %s5 = inlined_call_operand.hbm [shape: bf16[8,128], index: 5, kind: output, shape index: {}]
  %s6 = sld [smem:[#allocation0]]
  $region46: #{gan_generator_forward.1} parent=0
    _
  %s8 = ssub.s32 1, %s6
  %s9 = scalar_select 0, %s8, %s6
  $region1: #{gan_generator_forward.1} parent=0
    #allocation2 [shape = 'u8[4096]{0}', space=vmem, size = 0x1000, scoped, tag = 'input window, operand 0, single buffered']
    #allocation3 [shape = 's32[1]{0}', space=sflag, size = 0x4, scoped, tag = 'scoped memory for gan_generator_forward.1']
    #allocation4 [shape = 's32[1]{0}', space=sflag, size = 0x4, scoped, tag = 'scoped memory for gan_generator_forward.1']
    #allocation5 [shape = 'u8[8192]{0}', space=vmem, size = 0x2000, scoped, tag = 'input window, operand 1, single buffered']
    #allocation6 [shape = 's32[1]{0}', space=sflag, size = 0x4, scoped, tag = 'scoped memory for gan_generator_forward.1']
    #allocation7 [shape = 'u8[1024]{0}', space=vmem, size = 0x400, scoped, tag = 'input window, operand 2, single buffered']
    #allocation8 [shape = 'u8[65536]{0}', space=vmem, size = 0x10000, scoped, tag = 'input window, operand 3, single buffered']
    #allocation9 [shape = 's32[1]{0}', space=sflag, size = 0x4, scoped, tag = 'scoped memory for gan_generator_forward.1']
    #allocation10 [shape = 'u8[2048]{0}', space=vmem, size = 0x800, scoped, tag = 'output window, operand 0, single buffered']
    %10 = vsyncpa [#allocation3], 0
    %11 = vsyncpa [#allocation6], 0
    %12 = vsyncpa [#allocation9], 0
    %13 = vsyncpa [#allocation4], 0
    // Predicated region
    $region2: #{gan_generator_forward.1} parent=1 // pred_check
      _
    $region3: #{gan_generator_forward.1} parent=1 // pred_check_branch
      %15 = sbr.rel (0) target = $region5
    $region4: #{gan_generator_forward.1} parent=1 // pred_region
      %17 = vsyncadd [#allocation3], 0
      %s19 = sshll.u32 %s0, 4
      %s20 = int_to_ptr.hbm [resolvable:$true] %s19
      %s21 = sshll.u32 [#allocation2], 4
      %s22 = int_to_ptr.vmem [resolvable:$true] %s21
      %24 = dma.hbm_to_vmem [thread:$0]  %s20, 128, %s22, [#allocation3]
    $region5: #{gan_generator_forward.1} parent=1 // pred_fallthru
      _
    // Predicated region
    $region6: #{gan_generator_forward.1} parent=1 // pred_check
      _
    $region7: #{gan_generator_forward.1} parent=1 // pred_check_branch
      %26 = sbr.rel (0) target = $region9
    $region8: #{gan_generator_forward.1} parent=1 // pred_region
      %28 = vsyncadd [#allocation6], 0
      %s29 = sshll.u32 %s1, 4
      %s30 = int_to_ptr.hbm [resolvable:$true] %s29
      %s31 = sshll.u32 [#allocation5], 4
      %s32 = int_to_ptr.vmem [resolvable:$true] %s31
      %37 = dma.hbm_to_vmem [thread:$0]  %s30, 256, %s32, [#allocation6], 128, 128, 8
    $region9: #{gan_generator_forward.1} parent=1 // pred_fallthru
      _
    // Predicated region
    $region10: #{gan_generator_forward.1} parent=1 // pred_check
      _
    $region11: #{gan_generator_forward.1} parent=1 // pred_check_branch
      %39 = sbr.rel (0) target = $region13
    $region12: #{gan_generator_forward.1} parent=1 // pred_region
      %41 = vsyncadd [#allocation6], 0
      %s43 = sshll.u32 %s2, 4
      %s44 = int_to_ptr.hbm [resolvable:$true] %s43
      %s45 = sshll.u32 [#allocation7], 4
      %s46 = int_to_ptr.vmem [resolvable:$true] %s45
      %48 = dma.hbm_to_vmem [thread:$0]  %s44, 32, %s46, [#allocation6]
    $region13: #{gan_generator_forward.1} parent=1 // pred_fallthru
      _
    // Predicated region
    $region14: #{gan_generator_forward.1} parent=1 // pred_check
      _
    $region15: #{gan_generator_forward.1} parent=1 // pred_check_branch
      %50 = sbr.rel (0) target = $region17
    $region16: #{gan_generator_forward.1} parent=1 // pred_region
      %52 = vsyncadd [#allocation9], 0
      %s53 = sshll.u32 %s3, 4
      %s54 = int_to_ptr.hbm [resolvable:$true] %s53
      %s55 = sshll.u32 [#allocation8], 4
      %s56 = int_to_ptr.vmem [resolvable:$true] %s55
      %61 = dma.hbm_to_vmem [thread:$0]  %s54, 2048, %s56, [#allocation9], 64, 64, 4
    $region17: #{gan_generator_forward.1} parent=1 // pred_fallthru
      _
    // Predicated region
    $region18: #{gan_generator_forward.1} parent=1 // pred_check
      _
    $region19: #{gan_generator_forward.1} parent=1 // pred_check_branch
      %63 = sbr.rel (0) target = $region21
    $region20: #{gan_generator_forward.1} parent=1 // pred_region
      _
    $region21: #{gan_generator_forward.1} parent=1 // pred_fallthru
      _
    // Predicated region
    $region22: #{gan_generator_forward.1} parent=1 // pred_check
      _
    $region23: #{gan_generator_forward.1} parent=1 // pred_check_branch
      %65 = sbr.rel (0) target = $region25
    $region24: #{gan_generator_forward.1} parent=1 // pred_region
      %67 = dma.done [#allocation3], 128
    $region25: #{gan_generator_forward.1} parent=1 // pred_fallthru
      _
    // Predicated region
    $region26: #{gan_generator_forward.1} parent=1 // pred_check
      _
    $region27: #{gan_generator_forward.1} parent=1 // pred_check_branch
      %69 = sbr.rel (0) target = $region29
    $region28: #{gan_generator_forward.1} parent=1 // pred_region
      %71 = dma.done [#allocation6], 256
    $region29: #{gan_generator_forward.1} parent=1 // pred_fallthru
      _
    // Predicated region
    $region30: #{gan_generator_forward.1} parent=1 // pred_check
      _
    $region31: #{gan_generator_forward.1} parent=1 // pred_check_branch
      %73 = sbr.rel (0) target = $region33
    $region32: #{gan_generator_forward.1} parent=1 // pred_region
      %75 = dma.done [#allocation6], 32
    $region33: #{gan_generator_forward.1} parent=1 // pred_fallthru
      _
    // Predicated region
    $region34: #{gan_generator_forward.1} parent=1 // pred_check
      _
    $region35: #{gan_generator_forward.1} parent=1 // pred_check_branch
      %77 = sbr.rel (0) target = $region37
    $region36: #{gan_generator_forward.1} parent=1 // pred_region
      %79 = dma.done [#allocation9], 2048
    $region37: #{gan_generator_forward.1} parent=1 // pred_fallthru
      _
    %v81 = vld [vmem:[#allocation2] sm:$0xff]
    %v82 = vpack.c.bf16 %v81, %v81
    %v83 = vld [vmem:[#allocation5] sm:$0xff]
    %v84 = vld [vmem:[#allocation5 + $0x8] sm:$0xff]
    %v85 = vld [vmem:[#allocation7] sm:$0x3]
    %v87 = vperm.slane %v85, 0
    %v88 = vperm.slane %v85, 1
    %v93 = vunpack.c.l.b16 %v83
    %v94 = vunpack.c.h.b16 %v83
    %v95 = vunpack.c.l.b16 %v84
    %v96 = vunpack.c.h.b16 %v84
    %v97 = vpack.c.b16 %v95, %v93
    %v98 = vpack.c.b16 %v96, %v94
    %vm101 = vcmask 130048
    %v103 = vsel %vm101, %v82, 0
    %105 = vmatpush.bf16.msra.mxu0 0
    %106 = vmatpush.bf16.msra.mxu0 0
    %107 = vmatpush.bf16.msra.mxu0 0
    %108 = vmatpush.bf16.msra.mxu0 0
    %109 = vmatpush.bf16.msra.mxu0 0
    %110 = vmatpush.bf16.msra.mxu0 0
    %111 = vmatpush.bf16.msra.mxu0 0
    %112 = vmatpush.bf16.msra.mxu0 %v97
    %113 = vmatmul.bf16.gmra.mxu0 %v103
    %v114 = vpop.f32.mrf.mxu0
    %v115 = vadd.f32 %v87, %v114
    %v116 = vpop.f32.mrf.mxu0
    %117 = vdwg.mxu0
    %118 = vmatpush.bf16.msra.mxu0 0
    %119 = vmatpush.bf16.msra.mxu0 0
    %120 = vmatpush.bf16.msra.mxu0 0
    %121 = vmatpush.bf16.msra.mxu0 0
    %122 = vmatpush.bf16.msra.mxu0 0
    %123 = vmatpush.bf16.msra.mxu0 0
    %124 = vmatpush.bf16.msra.mxu0 0
    %125 = vmatpush.bf16.msra.mxu0 %v98
    %126 = vmatmul.bf16.gmra.mxu0 %v103
    %v127 = vpop.f32.mrf.mxu0
    %v128 = vadd.f32 %v88, %v127
    %v129 = vpop.f32.mrf.mxu0
    %130 = vdwg.mxu0
    %v131 = vmax.f32 %v115, 0.0
    %v132 = vmax.f32 %v128, 0.0
    %v133 = vpack.c.bf16 %v131, %v131
    %v134 = vpack.c.bf16 %v132, %v132
    %v135 = vld [vmem:[#allocation8] sm:$0xf]
    %v136 = vld [vmem:[#allocation8 + $0x4] sm:$0xf]
    %v137 = vld [vmem:[#allocation8 + $0x8] sm:$0xf]
    %v138 = vld [vmem:[#allocation8 + $0xc] sm:$0xf]
    %v139 = vld [vmem:[#allocation8 + $0x10] sm:$0xf]
    %v140 = vld [vmem:[#allocation8 + $0x14] sm:$0xf]
    %v141 = vld [vmem:[#allocation8 + $0x18] sm:$0xf]
    %v142 = vld [vmem:[#allocation8 + $0x1c] sm:$0xf]
    %v143 = vld [vmem:[#allocation8 + $0x20] sm:$0xf]
    %v144 = vld [vmem:[#allocation8 + $0x24] sm:$0xf]
    %v145 = vld [vmem:[#allocation8 + $0x28] sm:$0xf]
    %v146 = vld [vmem:[#allocation8 + $0x2c] sm:$0xf]
    %v147 = vld [vmem:[#allocation8 + $0x30] sm:$0xf]
    %v148 = vld [vmem:[#allocation8 + $0x34] sm:$0xf]
    %v149 = vld [vmem:[#allocation8 + $0x38] sm:$0xf]
    %v150 = vld [vmem:[#allocation8 + $0x3c] sm:$0xf]
    %v151 = vld [vmem:[#allocation8 + $0x40] sm:$0xf]
    %v152 = vld [vmem:[#allocation8 + $0x44] sm:$0xf]
    %v153 = vld [vmem:[#allocation8 + $0x48] sm:$0xf]
    %v154 = vld [vmem:[#allocation8 + $0x4c] sm:$0xf]
    %v155 = vld [vmem:[#allocation8 + $0x50] sm:$0xf]
    %v156 = vld [vmem:[#allocation8 + $0x54] sm:$0xf]
    %v157 = vld [vmem:[#allocation8 + $0x58] sm:$0xf]
    %v158 = vld [vmem:[#allocation8 + $0x5c] sm:$0xf]
    %v159 = vld [vmem:[#allocation8 + $0x60] sm:$0xf]
    %v160 = vld [vmem:[#allocation8 + $0x64] sm:$0xf]
    %v161 = vld [vmem:[#allocation8 + $0x68] sm:$0xf]
    %v162 = vld [vmem:[#allocation8 + $0x6c] sm:$0xf]
    %v163 = vld [vmem:[#allocation8 + $0x70] sm:$0xf]
    %v164 = vld [vmem:[#allocation8 + $0x74] sm:$0xf]
    %v165 = vld [vmem:[#allocation8 + $0x78] sm:$0xf]
    %v166 = vld [vmem:[#allocation8 + $0x7c] sm:$0xf]
    %v167 = vld [vmem:[%s4] sm:$0x1]
    %v169 = vperm.slane %v167, 0
    %v203 = vunpack.c.l.b16 %v135
    %v204 = vunpack.c.l.b16 %v136
    %v205 = vunpack.c.l.b16 %v137
    %v206 = vunpack.c.l.b16 %v138
    %v207 = vunpack.c.l.b16 %v139
    %v208 = vunpack.c.l.b16 %v140
    %v209 = vunpack.c.l.b16 %v141
    %v210 = vunpack.c.l.b16 %v142
    %v211 = vunpack.c.l.b16 %v143
    %v212 = vunpack.c.l.b16 %v144
    %v213 = vunpack.c.l.b16 %v145
    %v214 = vunpack.c.l.b16 %v146
    %v215 = vunpack.c.l.b16 %v147
    %v216 = vunpack.c.l.b16 %v148
    %v217 = vunpack.c.l.b16 %v149
    %v218 = vunpack.c.l.b16 %v150
    %v219 = vunpack.c.l.b16 %v151
    %v220 = vunpack.c.l.b16 %v152
    %v221 = vunpack.c.l.b16 %v153
    %v222 = vunpack.c.l.b16 %v154
    %v223 = vunpack.c.l.b16 %v155
    %v224 = vunpack.c.l.b16 %v156
    %v225 = vunpack.c.l.b16 %v157
    %v226 = vunpack.c.l.b16 %v158
    %v227 = vunpack.c.l.b16 %v159
    %v228 = vunpack.c.l.b16 %v160
    %v229 = vunpack.c.l.b16 %v161
    %v230 = vunpack.c.l.b16 %v162
    %v231 = vunpack.c.l.b16 %v163
    %v232 = vunpack.c.l.b16 %v164
    %v233 = vunpack.c.l.b16 %v165
    %v234 = vunpack.c.l.b16 %v166
    %v235 = vpack.c.b16 %v204, %v203
    %v236 = vpack.c.b16 %v206, %v205
    %v237 = vpack.c.b16 %v208, %v207
    %v238 = vpack.c.b16 %v210, %v209
    %v239 = vpack.c.b16 %v212, %v211
    %v240 = vpack.c.b16 %v214, %v213
    %v241 = vpack.c.b16 %v216, %v215
    %v242 = vpack.c.b16 %v218, %v217
    %v243 = vpack.c.b16 %v220, %v219
    %v244 = vpack.c.b16 %v222, %v221
    %v245 = vpack.c.b16 %v224, %v223
    %v246 = vpack.c.b16 %v226, %v225
    %v247 = vpack.c.b16 %v228, %v227
    %v248 = vpack.c.b16 %v230, %v229
    %v249 = vpack.c.b16 %v232, %v231
    %v250 = vpack.c.b16 %v234, %v233
    %267 = vmatpush.bf16.msra.mxu0 %v242
    %268 = vmatpush.bf16.msra.mxu0 %v241
    %269 = vmatpush.bf16.msra.mxu0 %v240
    %270 = vmatpush.bf16.msra.mxu0 %v239
    %271 = vmatpush.bf16.msra.mxu0 %v238
    %272 = vmatpush.bf16.msra.mxu0 %v237
    %273 = vmatpush.bf16.msra.mxu0 %v236
    %274 = vmatpush.bf16.msra.mxu0 %v235
    %275 = vmatmul.bf16.gmra.mxu0 %v133
    %v276 = vpop.f32.mrf.mxu0
    %v277 = vadd.f32 %v169, %v276
    %v278 = vpop.f32.mrf.mxu0
    %279 = vdwg.mxu0
    %280 = vmatpush.bf16.msra.mxu0 %v250
    %281 = vmatpush.bf16.msra.mxu0 %v249
    %282 = vmatpush.bf16.msra.mxu0 %v248
    %283 = vmatpush.bf16.msra.mxu0 %v247
    %284 = vmatpush.bf16.msra.mxu0 %v246
    %285 = vmatpush.bf16.msra.mxu0 %v245
    %286 = vmatpush.bf16.msra.mxu0 %v244
    %287 = vmatpush.bf16.msra.mxu0 %v243
    %288 = vmatmul.bf16.gmra.mxu0 %v134
    %v289 = vpop.f32.mrf.mxu0
    %v290 = vadd.f32 %v277, %v289
    %v291 = vpop.f32.mrf.mxu0
    %292 = vdwg.mxu0
    %v293 = vpack.c.bf16 %v290, %v290
    %294 = vst [vmem:[#allocation10] sm:$0xf] %v293
    // Predicated region
    $region38: #{gan_generator_forward.1} parent=1 // pred_check
      _
    $region39: #{gan_generator_forward.1} parent=1 // pred_check_branch
      %296 = sbr.rel (0) target = $region41
    $region40: #{gan_generator_forward.1} parent=1 // pred_region
      %298 = vsyncadd [#allocation4], 0
      %s300 = sshll.u32 [#allocation10], 4
      %s301 = int_to_ptr.vmem [resolvable:$true] %s300
      %s302 = sshll.u32 %s5, 4
      %s303 = int_to_ptr.hbm [resolvable:$true] %s302
      %305 = dma.vmem_to_hbm [thread:$0]  %s301, 64, %s303, [#allocation4]
    $region41: #{gan_generator_forward.1} parent=1 // pred_fallthru
      _
    // Predicated region
    $region42: #{gan_generator_forward.1} parent=1 // pred_check
      _
    $region43: #{gan_generator_forward.1} parent=1 // pred_check_branch
      %307 = sbr.rel (0) target = $region45
    $region44: #{gan_generator_forward.1} parent=1 // pred_region
      %309 = dma.done [#allocation4], 64
    $region45: #{gan_generator_forward.1} parent=1 // pred_fallthru
      _
    %310 = vsyncpa [#allocation3], 1
    %311 = vsyncpa [#allocation6], 1
    %312 = vsyncpa [#allocation9], 1
    %313 = vsyncpa [#allocation4], 1

</llo_original>
